<compile_context>
chip_gen: v5e
topology: v5e:2x2
jax: 0.10.0
libtpu: 0.0.40
codegen_flags: <defaults>
</compile_context>

<pallas_src>
import math
from functools import partial

import jax
import jax.numpy as jnp
from jax.experimental import pallas as pl
from jax.experimental.pallas import tpu as pltpu

_LANE = 128
_SUBLANE = 8


def _round_down(x, m):
    return max(m, (x // m) * m)


def _scales(Na, Nb, t):
    C = math.sqrt((Na + Nb) / ((1.0 - t) ** 2 + t ** 2))
    return C * (1.0 - t) / math.sqrt(Na), C * t / math.sqrt(Nb)


def _vmem_budget():
    """Return (vmem_limit_bytes, per-grid-step tile budget in bytes)."""
    try:
        cap = int(pltpu.get_tpu_info().vmem_capacity_bytes)
    except Exception:  # be conservative (v7x per-core VMEM)
        cap = 64 * 1024 * 1024
    vmem_limit = min(cap // 2, 64 * 1024 * 1024)           # 64 MiB v5e/v6e, 32 MiB v7x
    tile_budget = min(vmem_limit // 2, 16 * 1024 * 1024)   # dbl-buffered a+b+out per step
    return vmem_limit, tile_budget


# ---------------------------------------------------------------------------
# Kernels
# ---------------------------------------------------------------------------

def _mpcat_kernel_sublane(a_ref, b_ref, o_ref, *, na, scale_a, scale_b):
    # Blocks: a (tl, Na, tt), b (tl, Nb, tt), out (tl, Na+Nb, tt).
    # Concat split rides the sublane axis; lanes (tt, multiple of 128 or full)
    # stay dense and unmasked.  Multiply in f32, cast once on store.
    # (For bf16/int8 inputs an Na that is a multiple of the sublane packing
    #  factor keeps the second store unmasked as well; correctness is
    #  unaffected either way.)
    o_ref[:, :na, :] = (a_ref[...].astype(jnp.float32) * scale_a).astype(o_ref.dtype)
    o_ref[:, na:, :] = (b_ref[...].astype(jnp.float32) * scale_b).astype(o_ref.dtype)


def _mpcat_kernel_lane(a_ref, b_ref, o_ref, *, na, scale_a, scale_b):
    # Blocks: a (tr, Na), b (tr, Nb), out (tr, Na+Nb).  Only used when Na and
    # Nb are multiples of 128, so both lane-offset stores are unmasked.
    o_ref[:, :na] = (a_ref[...].astype(jnp.float32) * scale_a).astype(o_ref.dtype)
    o_ref[:, na:] = (b_ref[...].astype(jnp.float32) * scale_b).astype(o_ref.dtype)


# ---------------------------------------------------------------------------
# Pallas runners
# ---------------------------------------------------------------------------

def _mpcat_sublane(a3, b3, t):
    """a3: (L, Na, T), b3: (L, Nb, T) -> out: (L, Na+Nb, T)."""
    L, Na, T = a3.shape
    Nb = b3.shape[1]
    Nt = Na + Nb
    out_dtype = jnp.result_type(a3.dtype, b3.dtype)
    isa = jnp.dtype(a3.dtype).itemsize
    isb = jnp.dtype(b3.dtype).itemsize
    iso = jnp.dtype(out_dtype).itemsize
    scale_a, scale_b = _scales(Na, Nb, t)
    vmem_limit, tile_budget = _vmem_budget()

    # Double-buffered VMEM bytes per (tl=1, tt=1) column of one grid step.
    per_col = 2 * (Na * isa + Nb * isb + Nt * iso)
    budget_cols = max(_LANE, tile_budget // per_col)

    # Lane-axis tile: as big as the budget allows, multiple of 128 (or all of T).
    tt = T if T <= budget_cols else _round_down(budget_cols, _LANE)
    # Leading-axis tile: soak up leftover budget when T alone is small.
    tl = int(min(L, max(1, budget_cols // tt)))

    # v7x has two TensorCores: keep >= 2 parallel grid steps for big tensors.
    if pl.cdiv(L, tl) * pl.cdiv(T, tt) == 1 and L * Nt * T * iso > (4 << 20):
        if T >= 2 * _LANE:
            tt = _round_down(pl.cdiv(T, 2), _LANE)
        elif L >= 2:
            tl = pl.cdiv(L, 2)

    grid = (pl.cdiv(L, tl), pl.cdiv(T, tt))
    kernel = partial(_mpcat_kernel_sublane, na=Na, scale_a=scale_a, scale_b=scale_b)
    return pl.pallas_call(
        kernel,
        out_shape=jax.ShapeDtypeStruct((L, Nt, T), out_dtype),
        grid_spec=pltpu.PrefetchScalarGridSpec(
            num_scalar_prefetch=0,
            grid=grid,
            in_specs=[
                pl.BlockSpec((tl, Na, tt), lambda i, j: (i, 0, j)),
                pl.BlockSpec((tl, Nb, tt), lambda i, j: (i, 0, j)),
            ],
            out_specs=pl.BlockSpec((tl, Nt, tt), lambda i, j: (i, 0, j)),
        ),
        compiler_params=pltpu.CompilerParams(
            dimension_semantics=("parallel", "parallel"),
            vmem_limit_bytes=int(vmem_limit),
        ),
    )(a3, b3)


def _mpcat_lane(a2, b2, t):
    """a2: (R, Na), b2: (R, Nb) -> out: (R, Na+Nb); Na, Nb multiples of 128."""
    R, Na = a2.shape
    Nb = b2.shape[1]
    Nt = Na + Nb
    out_dtype = jnp.result_type(a2.dtype, b2.dtype)
    isa = jnp.dtype(a2.dtype).itemsize
    isb = jnp.dtype(b2.dtype).itemsize
    iso = jnp.dtype(out_dtype).itemsize
    scale_a, scale_b = _scales(Na, Nb, t)
    vmem_limit, tile_budget = _vmem_budget()

    per_row = 2 * (Na * isa + Nb * isb + Nt * iso)
    budget_rows = max(_SUBLANE, tile_budget // per_row)
    tr = R if R <= budget_rows else _round_down(budget_rows, _SUBLANE)
    if pl.cdiv(R, tr) == 1 and R * Nt * iso > (4 << 20) and R >= 2 * _SUBLANE:
        tr = _round_down(pl.cdiv(R, 2), _SUBLANE)

    grid = (pl.cdiv(R, tr),)
    kernel = partial(_mpcat_kernel_lane, na=Na, scale_a=scale_a, scale_b=scale_b)
    return pl.pallas_call(
        kernel,
        out_shape=jax.ShapeDtypeStruct((R, Nt), out_dtype),
        grid_spec=pltpu.PrefetchScalarGridSpec(
            num_scalar_prefetch=0,
            grid=grid,
            in_specs=[
                pl.BlockSpec((tr, Na), lambda i: (i, 0)),
                pl.BlockSpec((tr, Nb), lambda i: (i, 0)),
            ],
            out_specs=pl.BlockSpec((tr, Nt), lambda i: (i, 0)),
        ),
        compiler_params=pltpu.CompilerParams(
            dimension_semantics=("parallel",),
            vmem_limit_bytes=int(vmem_limit),
        ),
    )(a2, b2)


# ---------------------------------------------------------------------------
# Public wrapper (MPCat.forward equivalent)
# ---------------------------------------------------------------------------

def mp_cat(a, b, t=0.5, dim=-1, *, force_pallas=False):
    """JAX/Pallas equivalent of MPCat(t, dim).forward(a, b)."""
    assert a.ndim == b.ndim
    ndim = a.ndim
    axis = dim % ndim
    Na, Nb = a.shape[axis], b.shape[axis]
    assert a.shape[:axis] + a.shape[axis + 1:] == b.shape[:axis] + b.shape[axis + 1:]
    out_shape = list(a.shape)
    out_shape[axis] = Na + Nb

    out_dtype = jnp.result_type(a.dtype, b.dtype)
    total_bytes = (a.size + b.size) * jnp.dtype(out_dtype).itemsize
    if not force_pallas and total_bytes < (1 << 20):
        # Tiny inputs: a fused XLA scale+concat beats kernel launch + reshapes.
        return _reference(a, b, t, dim)

    if axis == ndim - 1:
        if Na % _LANE == 0 and Nb % _LANE == 0:
            # Native layout is already lane-dense with a 128-aligned split:
            # no transpose needed.
            R = a.size // Na
            out2 = _mpcat_lane(a.reshape(R, Na), b.reshape(R, Nb), t)
            return out2.reshape(out_shape)
        # Concat axis is last and narrow: flip once so it rides sublanes and
        # the big flattened axis rides lanes (unmasked, lane-dense stores).
        rest = [a.shape[i] for i in range(ndim) if i != axis]
        a3 = jnp.moveaxis(a, axis, 0).reshape(1, Na, -1)
        b3 = jnp.moveaxis(b, axis, 0).reshape(1, Nb, -1)
        out3 = _mpcat_sublane(a3, b3, t)
        return jnp.moveaxis(out3.reshape(Na + Nb, *rest), 0, axis)

    # Concat axis not last: native layout already has the big trailing axes
    # last -> zero-copy reshape, no transpose.
    L = math.prod(a.shape[:axis])
    T = math.prod(a.shape[axis + 1:])
    out3 = _mpcat_sublane(a.reshape(L, Na, T), b.reshape(L, Nb, T), t)
    return out3.reshape(out_shape)


def _reference(a, b, t=0.5, dim=-1):
    Na, Nb = a.shape[dim], b.shape[dim]
    C = math.sqrt((Na + Nb) / ((1.0 - t) ** 2 + t ** 2))
    a = a * ((1.0 - t) / math.sqrt(Na))
    b = b * (t / math.sqrt(Nb))
    return C * jnp.concatenate((a, b), axis=dim)


if __name__ == "__main__":
    key = jax.random.PRNGKey(0)
    ka, kb, kc, kd = jax.random.split(key, 4)

    # 1) Spec-sized NCHW-like tensors, module default dim=-1 (narrow last axis
    #    -> transposed sublane-concat kernel path).
    a = jax.random.normal(ka, (2, 4, 16, 16), dtype=jnp.float32)
    b = jax.random.normal(kb, (2, 4, 16, 16), dtype=jnp.float32)
    out = jax.block_until_ready(mp_cat(a, b, t=0.5, dim=-1, force_pallas=True))
    ref = _reference(a, b, t=0.5, dim=-1)
    assert out.shape == ref.shape == (2, 4, 16, 32)
    assert jnp.allclose(out, ref, atol=1e-5, rtol=1e-5)

    # 2) Channel concat (dim=1) on NCHW: no-transpose reshape path, concat on
    #    the sublane axis with H*W on lanes.
    a2 = jax.random.normal(kc, (2, 8, 16, 16), dtype=jnp.float32)
    b2 = jax.random.normal(kd, (2, 8, 16, 16), dtype=jnp.float32)
    out2 = jax.block_until_ready(mp_cat(a2, b2, t=0.5, dim=1, force_pallas=True))
    ref2 = _reference(a2, b2, t=0.5, dim=1)
    assert out2.shape == (2, 16, 16, 16)
    assert jnp.allclose(out2, ref2, atol=1e-5, rtol=1e-5)

    # 3) Wide 128-aligned last-axis concat: native lane-concat kernel path.
    a3 = jax.random.normal(ka, (2, 8, 256), dtype=jnp.float32)
    b3 = jax.random.normal(kb, (2, 8, 256), dtype=jnp.float32)
    out3 = jax.block_until_ready(mp_cat(a3, b3, t=0.5, dim=-1, force_pallas=True))
    ref3 = _reference(a3, b3, t=0.5, dim=-1)
    assert out3.shape == (2, 8, 512)
    assert jnp.allclose(out3, ref3, atol=1e-5, rtol=1e-5)

    print("KERNEL_OK")
</pallas_src>

<mosaic_0001>
module attributes {stable_mosaic.version = 11 : i64} {
  func.func @_mpcat_kernel_sublane(%arg0: i32, %arg1: i32, %arg2: memref<1x16x128xf32, #tpu.memory_space<vmem>>, %arg3: memref<1x16x128xf32, #tpu.memory_space<vmem>>, %arg4: memref<1x32x128xf32, #tpu.memory_space<vmem>>) attributes {dimension_semantics = [#tpu.dimension_semantics<parallel>, #tpu.dimension_semantics<parallel>], iteration_bounds = array<i64: 1, 1>, scalar_prefetch = 0 : i64, scratch_operands = 0 : i64, tpu.core_type = #tpu.core_type<tc>, window_params = [{transform_indices = @transform_0, window_bounds = array<i64: 1, 16, 128>}, {transform_indices = @transform_1, window_bounds = array<i64: 1, 16, 128>}, {transform_indices = @transform_2, window_bounds = array<i64: 1, 32, 128>}]} {
    %c0 = arith.constant 0 : index
    %c0_0 = arith.constant 0 : index
    %c0_1 = arith.constant 0 : index
    %0 = vector.load %arg2[%c0, %c0_0, %c0_1] : memref<1x16x128xf32, #tpu.memory_space<vmem>>, vector<1x16x128xf32>
    %cst = arith.constant 1.000000e+00 : f32
    %1 = vector.broadcast %cst : f32 to vector<1x16x128xf32>
    %2 = arith.mulf %0, %1 : vector<1x16x128xf32>
    %c0_2 = arith.constant 0 : index
    %c0_3 = arith.constant 0 : index
    %c0_4 = arith.constant 0 : index
    %3 = vector.load %arg4[%c0_2, %c0_3, %c0_4] : memref<1x32x128xf32, #tpu.memory_space<vmem>>, vector<1x16x128xf32>
    tpu.vector_store %arg4[%c0_2, %c0_3, %c0_4], %2 {strides = array<i32>} : memref<1x32x128xf32, #tpu.memory_space<vmem>>, vector<1x16x128xf32>,
    %c0_5 = arith.constant 0 : index
    %c0_6 = arith.constant 0 : index
    %c0_7 = arith.constant 0 : index
    %4 = vector.load %arg3[%c0_5, %c0_6, %c0_7] : memref<1x16x128xf32, #tpu.memory_space<vmem>>, vector<1x16x128xf32>
    %cst_8 = arith.constant 1.000000e+00 : f32
    %5 = vector.broadcast %cst_8 : f32 to vector<1x16x128xf32>
    %6 = arith.mulf %4, %5 : vector<1x16x128xf32>
    %c0_9 = arith.constant 0 : index
    %c16 = arith.constant 16 : index
    %c0_10 = arith.constant 0 : index
    %7 = vector.load %arg4[%c0_9, %c16, %c0_10] : memref<1x32x128xf32, #tpu.memory_space<vmem>>, vector<1x16x128xf32>
    tpu.vector_store %arg4[%c0_9, %c16, %c0_10], %6 {strides = array<i32>} : memref<1x32x128xf32, #tpu.memory_space<vmem>>, vector<1x16x128xf32>,
    return
  }
  func.func @transform_0(%arg0: i32, %arg1: i32) -> (i32, i32, i32) {
    %c0_i32 = arith.constant 0 : i32
    %c0_i32_0 = arith.constant 0 : i32
    return %arg0, %c0_i32, %arg1 : i32, i32, i32
  }
  func.func @transform_1(%arg0: i32, %arg1: i32) -> (i32, i32, i32) {
    %c0_i32 = arith.constant 0 : i32
    %c0_i32_0 = arith.constant 0 : i32
    return %arg0, %c0_i32, %arg1 : i32, i32, i32
  }
  func.func @transform_2(%arg0: i32, %arg1: i32) -> (i32, i32, i32) {
    %c0_i32 = arith.constant 0 : i32
    %c0_i32_0 = arith.constant 0 : i32
    return %arg0, %c0_i32, %arg1 : i32, i32, i32
  }
}

</mosaic_0001>

<llo_original>
// kernel: tpu_custom_call.1
$region0: #{tpu_custom_call.1}
  #allocation0 [shape = 'u32[]', space=smem, size = 0x4, offset = 0x4, fixed_abs, tag = 'smem constant byte address 0x4 - core index']
  #allocation1 [shape = 'u32[72,128]{1,0:T(1,128)}', space=vmem, size = 0x9000, scoped, tag = 'internal scratch']
  %s0 = inlined_call_operand.hbm [shape: f32[1,16,128], index: 0, kind: input, shape index: {}]
  %s1 = inlined_call_operand.hbm [shape: f32[1,16,128], index: 1, kind: input, shape index: {}]
  %s2 = inlined_call_operand.hbm [shape: f32[1,32,128], index: 2, kind: output, shape index: {}]
  %s3 = sld [smem:[#allocation0]]
  $region26: #{tpu_custom_call.1} parent=0
    _
  %s5 = ssub.s32 1, %s3
  %s6 = scalar_select 0, %s5, %s3
  $region1: #{tpu_custom_call.1} parent=0
    #allocation2 [shape = 'u8[8192]{0}', space=vmem, size = 0x2000, scoped, tag = 'input window, operand 0, single buffered']
    #allocation3 [shape = 's32[1]{0}', space=sflag, size = 0x4, scoped, tag = 'scoped memory for tpu_custom_call.1']
    #allocation4 [shape = 's32[1]{0}', space=sflag, size = 0x4, scoped, tag = 'scoped memory for tpu_custom_call.1']
    #allocation5 [shape = 'u8[8192]{0}', space=vmem, size = 0x2000, scoped, tag = 'input window, operand 1, single buffered']
    #allocation6 [shape = 's32[1]{0}', space=sflag, size = 0x4, scoped, tag = 'scoped memory for tpu_custom_call.1']
    #allocation7 [shape = 'u8[16384]{0}', space=vmem, size = 0x4000, scoped, tag = 'output window, operand 0, single buffered']
    %7 = vsyncpa [#allocation3], 0
    %8 = vsyncpa [#allocation6], 0
    %9 = vsyncpa [#allocation4], 0
    // Predicated region
    $region2: #{tpu_custom_call.1} parent=1 // pred_check
      _
    $region3: #{tpu_custom_call.1} parent=1 // pred_check_branch
      %11 = sbr.rel (0) target = $region5
    $region4: #{tpu_custom_call.1} parent=1 // pred_region
      %13 = vsyncadd [#allocation3], 0
      %s14 = sshll.u32 %s0, 4
      %s15 = int_to_ptr.hbm [resolvable:$true] %s14
      %s16 = sshll.u32 [#allocation2], 4
      %s17 = int_to_ptr.vmem [resolvable:$true] %s16
      %22 = dma.hbm_to_vmem [thread:$0]  %s15, 256, %s17, [#allocation3], 128, 128, 8
    $region5: #{tpu_custom_call.1} parent=1 // pred_fallthru
      _
    // Predicated region
    $region6: #{tpu_custom_call.1} parent=1 // pred_check
      _
    $region7: #{tpu_custom_call.1} parent=1 // pred_check_branch
      %24 = sbr.rel (0) target = $region9
    $region8: #{tpu_custom_call.1} parent=1 // pred_region
      %26 = vsyncadd [#allocation6], 0
      %s27 = sshll.u32 %s1, 4
      %s28 = int_to_ptr.hbm [resolvable:$true] %s27
      %s29 = sshll.u32 [#allocation5], 4
      %s30 = int_to_ptr.vmem [resolvable:$true] %s29
      %35 = dma.hbm_to_vmem [thread:$0]  %s28, 256, %s30, [#allocation6], 128, 128, 8
    $region9: #{tpu_custom_call.1} parent=1 // pred_fallthru
      _
    // Predicated region
    $region10: #{tpu_custom_call.1} parent=1 // pred_check
      _
    $region11: #{tpu_custom_call.1} parent=1 // pred_check_branch
      %37 = sbr.rel (0) target = $region13
    $region12: #{tpu_custom_call.1} parent=1 // pred_region
      %39 = dma.done [#allocation3], 256
    $region13: #{tpu_custom_call.1} parent=1 // pred_fallthru
      _
    // Predicated region
    $region14: #{tpu_custom_call.1} parent=1 // pred_check
      _
    $region15: #{tpu_custom_call.1} parent=1 // pred_check_branch
      %41 = sbr.rel (0) target = $region17
    $region16: #{tpu_custom_call.1} parent=1 // pred_region
      %43 = dma.done [#allocation6], 256
    $region17: #{tpu_custom_call.1} parent=1 // pred_fallthru
      _
    %v44 = vld [vmem:[#allocation2] sm:$0xff]
    %v45 = vld [vmem:[#allocation2 + $0x8] sm:$0xff]
    %46 = vst [vmem:[#allocation7] sm:$0xff] %v44
    %47 = vst [vmem:[#allocation7 + $0x8] sm:$0xff] %v45
    %v48 = vld [vmem:[#allocation5] sm:$0xff]
    %v49 = vld [vmem:[#allocation5 + $0x8] sm:$0xff]
    %50 = vst [vmem:[#allocation7 + $0x10] sm:$0xff] %v48
    %51 = vst [vmem:[#allocation7 + $0x18] sm:$0xff] %v49
    // Predicated region
    $region18: #{tpu_custom_call.1} parent=1 // pred_check
      _
    $region19: #{tpu_custom_call.1} parent=1 // pred_check_branch
      %53 = sbr.rel (0) target = $region21
    $region20: #{tpu_custom_call.1} parent=1 // pred_region
      %55 = vsyncadd [#allocation4], 0
      %s56 = sshll.u32 [#allocation7], 4
      %s57 = int_to_ptr.vmem [resolvable:$true] %s56
      %s58 = sshll.u32 %s2, 4
      %s59 = int_to_ptr.hbm [resolvable:$true] %s58
      %64 = dma.vmem_to_hbm [thread:$0]  %s57, 512, %s59, [#allocation4], 128, 128, 8
    $region21: #{tpu_custom_call.1} parent=1 // pred_fallthru
      _
    // Predicated region
    $region22: #{tpu_custom_call.1} parent=1 // pred_check
      _
    $region23: #{tpu_custom_call.1} parent=1 // pred_check_branch
      %66 = sbr.rel (0) target = $region25
    $region24: #{tpu_custom_call.1} parent=1 // pred_region
      %68 = dma.done [#allocation4], 512
    $region25: #{tpu_custom_call.1} parent=1 // pred_fallthru
      _
    %69 = vsyncpa [#allocation3], 1
    %70 = vsyncpa [#allocation6], 1
    %71 = vsyncpa [#allocation4], 1

</llo_original>
